<compile_context>
chip_gen: v7x
topology: tpu7x:2x2x1
jax: 0.10.0
libtpu: 0.0.40
codegen_flags: <defaults>
</compile_context>

<pallas_src>
import math
from functools import partial

import jax
import jax.numpy as jnp
from jax import lax
from jax.experimental import pallas as pl
from jax.experimental.pallas import tpu as pltpu


def _round_up(n, m):
    return ((n + m - 1) // m) * m


def _largest_aligned_divisor(n, align, max_tile):
    """Largest multiple of `align` that divides `n` and is <= max_tile.
    `n` must be a multiple of `align`."""
    t = max(align, min(max_tile, n))
    t -= t % align
    t = max(t, align)
    while n % t:
        t -= align
    return t


_VMEM_LIMIT = 48 * 1024 * 1024    # < v7x's 64 MiB physical VMEM
_VMEM_BUDGET = 20 * 1024 * 1024   # per-step double-buffered working-set target


# --------------------------------------------------------------------------
# Row L2 normalization (F.normalize, eps=1e-12) -> bf16.
#   x / max(||x||, eps) == x * rsqrt(max(||x||^2, eps^2))   (rsqrt -> EUP)
# Used as a pre-pass for the weights only (they are re-read once per B-tile).
# --------------------------------------------------------------------------
def _rownorm_kernel(x_ref, o_ref):
    x = x_ref[...]
    ssq = jnp.sum(x * x, axis=-1, keepdims=True)
    inv = lax.rsqrt(jnp.maximum(ssq, jnp.float32(1e-24)))
    o_ref[...] = (x * inv).astype(o_ref.dtype)


def _row_normalize_bf16(x_pad, tile_rows):
    rows, e_pad = x_pad.shape
    return pl.pallas_call(
        _rownorm_kernel,
        out_shape=jax.ShapeDtypeStruct((rows, e_pad), jnp.bfloat16),
        grid=(rows // tile_rows,),
        in_specs=[pl.BlockSpec((tile_rows, e_pad), lambda i: (i, 0))],
        out_specs=pl.BlockSpec((tile_rows, e_pad), lambda i: (i, 0)),
        compiler_params=pltpu.CompilerParams(
            dimension_semantics=("parallel",),
            vmem_limit_bytes=_VMEM_LIMIT),
    )(x_pad)


# --------------------------------------------------------------------------
# Pass 1: per-(tb, tc) tile matmul on the MXU; accumulate per-row exp-sums
# (target entries zeroed) and per-row target logits across the C tiles.
# The logits tile never leaves VMEM.  x is normalized in-kernel once per
# B-tile and emitted as bf16 for reuse in pass 2.
# --------------------------------------------------------------------------
def _adacos_stats_kernel(s_ref, x_ref, w_ref, lab_ref,
                         esum_ref, tgt_ref, xn_ref,
                         esum_acc, tgt_acc, *, tc):
    j = pl.program_id(1)
    nc = pl.num_programs(1)

    @pl.when(j == 0)
    def _():
        # Fused x row-normalization (resident tile, once per B-tile).
        x = x_ref[...]
        ssq = jnp.sum(x * x, axis=-1, keepdims=True)
        inv = lax.rsqrt(jnp.maximum(ssq, jnp.float32(1e-24)))
        xn_ref[...] = (x * inv).astype(xn_ref.dtype)
        esum_acc[...] = jnp.zeros_like(esum_acc)
        tgt_acc[...] = jnp.zeros_like(tgt_acc)

    # bf16 x bf16 -> f32 accumulation on the MXU.
    logits = lax.dot_general(xn_ref[...], w_ref[...],
                             (((1,), (1,)), ((), ())),
                             preferred_element_type=jnp.float32)

    s = s_ref[0, 0]                      # scalar (old s) in SMEM
    labels = lab_ref[...]                # (tb, 1) int32; -1 never matches col_g
    col_g = j * tc + lax.broadcasted_iota(jnp.int32, logits.shape, 1)
    tgt_mask = col_g == labels

    e = jnp.where(tgt_mask, jnp.float32(0.0), jnp.exp(s * logits))
    tgt_vals = jnp.where(tgt_mask, logits, jnp.float32(0.0))

    # Lane-dense partial reduction: fold tc lanes down to 128 on the VPU;
    # the single cross-lane (XLU) reduce happens only on the last C tile.
    def _fold128(a):
        acc = a[:, 0:128]
        for kk in range(1, tc // 128):
            acc = acc + a[:, kk * 128:(kk + 1) * 128]
        return acc

    esum_acc[...] += _fold128(e)
    tgt_acc[...] += _fold128(tgt_vals)

    @pl.when(j == nc - 1)
    def _():
        esum_ref[...] = jnp.sum(esum_acc[...], axis=1, keepdims=True)
        tgt_ref[...] = jnp.sum(tgt_acc[...], axis=1, keepdims=True)


# --------------------------------------------------------------------------
# Pass 2: recompute the bf16 matmul and write s_new * logits directly.
# (Slab is written once as f32; no read-back of a stored intermediate.)
# --------------------------------------------------------------------------
def _adacos_scale_kernel(s_ref, xn_ref, w_ref, out_ref):
    logits = lax.dot_general(xn_ref[...], w_ref[...],
                             (((1,), (1,)), ((), ())),
                             preferred_element_type=jnp.float32)
    out_ref[...] = s_ref[0, 0] * logits


def adacos_forward(x, weight, labels, s_init):
    """Returns (scaled_logits, new_s), matching AdaCos.forward semantics."""
    x = jnp.asarray(x, jnp.float32)
    weight = jnp.asarray(weight, jnp.float32)
    labels = jnp.asarray(labels, jnp.int32)
    B, E = x.shape
    C, _ = weight.shape

    # ---- alignment-only padding (no tile-induced blow-up) -----------------
    E_pad = _round_up(E, 128)
    B_pad = _round_up(B, 8)
    C_pad = _round_up(C, 128)

    # ---- tile selection: large divisors of the padded dims ----------------
    max_tb = 512
    if 16 <= B_pad <= 2 * max_tb:
        max_tb = max(8, B_pad // 2)        # keep nb >= 2 for v7x megacore
    tb = _largest_aligned_divisor(B_pad, 8, max_tb)
    tc = _largest_aligned_divisor(C_pad, 128, 1024)

    def _vmem_bytes(tb_, tc_):
        return (2 * tb_ * E_pad * 4        # x f32 input (double buffered)
                + 2 * tc_ * E_pad * 2      # w_n bf16 input
                + 2 * tb_ * E_pad * 2      # x_n bf16 output
                + 2 * tb_ * tc_ * 4        # logits / exp temporaries
                + 4 * tb_ * 128 * 4)       # accumulators + (tb,1) outputs

    while _vmem_bytes(tb, tc) > _VMEM_BUDGET and (tb > 8 or tc > 128):
        if tc > 128 and (tc >= tb or tb <= 8):
            tc = _largest_aligned_divisor(C_pad, 128, max(128, tc // 2))
        elif tb > 8:
            tb = _largest_aligned_divisor(B_pad, 8, max(8, tb // 2))
        else:
            break
    nb, nc = B_pad // tb, C_pad // tc

    # ---- padded operands ---------------------------------------------------
    x_pad = jnp.zeros((B_pad, E_pad), jnp.float32).at[:B, :E].set(x)
    w_pad = jnp.zeros((C_pad, E_pad), jnp.float32).at[:C, :E].set(weight)
    lab_pad = jnp.full((B_pad, 1), -1, jnp.int32).at[:B, 0].set(labels)

    # ---- weight normalization pre-pass (large memory-bound tiles) ---------
    tw = _largest_aligned_divisor(C_pad, 8, 1024)
    while tw > 8 and 12 * tw * E_pad > _VMEM_BUDGET:
        tw = _largest_aligned_divisor(C_pad, 8, max(8, tw // 2))
    w_n = _row_normalize_bf16(w_pad, tw)

    s_arr = jnp.full((1, 1), s_init, dtype=jnp.float32)

    # ---- pass 1: statistics (no B x C slab written to HBM) ----------------
    stats_kernel = partial(_adacos_stats_kernel, tc=tc)
    esum, tgt, x_n = pl.pallas_call(
        stats_kernel,
        out_shape=(
            jax.ShapeDtypeStruct((B_pad, 1), jnp.float32),       # exp sums
            jax.ShapeDtypeStruct((B_pad, 1), jnp.float32),       # target logits
            jax.ShapeDtypeStruct((B_pad, E_pad), jnp.bfloat16),  # normalized x
        ),
        grid=(nb, nc),
        in_specs=[
            pl.BlockSpec(memory_space=pltpu.MemorySpace.SMEM),   # s (scalar)
            pl.BlockSpec((tb, E_pad), lambda i, j: (i, 0)),      # x (f32)
            pl.BlockSpec((tc, E_pad), lambda i, j: (j, 0)),      # w_n (bf16)
            pl.BlockSpec((tb, 1), lambda i, j: (i, 0)),          # labels
        ],
        out_specs=(
            pl.BlockSpec((tb, 1), lambda i, j: (i, 0)),
            pl.BlockSpec((tb, 1), lambda i, j: (i, 0)),
            pl.BlockSpec((tb, E_pad), lambda i, j: (i, 0)),
        ),
        scratch_shapes=[pltpu.VMEM((tb, 128), jnp.float32),
                        pltpu.VMEM((tb, 128), jnp.float32)],
        compiler_params=pltpu.CompilerParams(
            dimension_semantics=("parallel", "arbitrary"),
            vmem_limit_bytes=_VMEM_LIMIT),
        cost_estimate=pl.CostEstimate(
            flops=2 * B_pad * C_pad * E_pad,
            transcendentals=B_pad * C_pad,
            bytes_accessed=(B_pad * E_pad * 4 + nb * C_pad * E_pad * 2
                            + B_pad * E_pad * 2 + 3 * B_pad * 4)),
    )(s_arr, x_pad, w_n, lab_pad)

    # ---- tiny O(B) statistics (torch.no_grad block), plain-JAX glue -------
    valid = labels != -1
    n_valid = jnp.sum(valid.astype(jnp.int32))
    tgt_logit = tgt[:B, 0]
    theta = jnp.arccos(jnp.clip(tgt_logit, -1.0, 1.0))
    theta = jnp.where(valid, theta, jnp.inf)
    theta_sorted = jnp.sort(theta)
    # torch.median returns the lower median: sorted[(n_valid - 1) // 2]
    k = jnp.maximum(n_valid - 1, 0) // 2
    theta_med = jnp.take(theta_sorted, k)

    # Padded (zero) weight columns contribute exp(s*0) = 1 per real row.
    bavg = (jnp.sum(esum[:B, 0]) - jnp.float32(B * (C_pad - C))) / jnp.float32(B)
    s_new = jnp.log(bavg + 1e-6) / (
        jnp.cos(jnp.minimum(jnp.float32(math.pi / 4), theta_med)) + 1e-6)

    # ---- pass 2: recompute matmul, write s_new * logits (single f32 write)
    s_new_arr = jnp.reshape(s_new, (1, 1)).astype(jnp.float32)
    out_pad = pl.pallas_call(
        _adacos_scale_kernel,
        out_shape=jax.ShapeDtypeStruct((B_pad, C_pad), jnp.float32),
        grid=(nb, nc),
        in_specs=[
            pl.BlockSpec(memory_space=pltpu.MemorySpace.SMEM),
            pl.BlockSpec((tb, E_pad), lambda i, j: (i, 0)),      # x_n (bf16)
            pl.BlockSpec((tc, E_pad), lambda i, j: (j, 0)),      # w_n (bf16)
        ],
        out_specs=pl.BlockSpec((tb, tc), lambda i, j: (i, j)),
        compiler_params=pltpu.CompilerParams(
            dimension_semantics=("parallel", "parallel"),
            vmem_limit_bytes=_VMEM_LIMIT),
        cost_estimate=pl.CostEstimate(
            flops=2 * B_pad * C_pad * E_pad,
            transcendentals=0,
            bytes_accessed=(B_pad * E_pad * 2 + nb * C_pad * E_pad * 2
                            + B_pad * C_pad * 4)),
    )(s_new_arr, x_n, w_n)

    return out_pad[:B, :C], s_new


# --------------------------------------------------------------------------
# Pure-JAX fp32 reference (mirrors the torch module) for a sanity check.
# --------------------------------------------------------------------------
def adacos_reference(x, weight, labels, s_init):
    xn = x / jnp.maximum(jnp.linalg.norm(x, axis=1, keepdims=True), 1e-12)
    wn = weight / jnp.maximum(jnp.linalg.norm(weight, axis=1, keepdims=True), 1e-12)
    logits = xn @ wn.T
    B, C = logits.shape
    valid = labels != -1
    tgt_cols = jnp.arange(C)[None, :] == labels[:, None]
    b = jnp.where(valid[:, None] & tgt_cols, 0.0, jnp.exp(s_init * logits))
    b_avg = jnp.sum(b) / B
    tgt = jnp.take_along_axis(logits, jnp.maximum(labels, 0)[:, None], axis=1)[:, 0]
    theta = jnp.where(valid, jnp.arccos(jnp.clip(tgt, -1.0, 1.0)), jnp.inf)
    n_valid = jnp.sum(valid.astype(jnp.int32))
    k = jnp.maximum(n_valid - 1, 0) // 2
    theta_med = jnp.sort(theta)[k]
    s_new = jnp.log(b_avg + 1e-6) / (
        jnp.cos(jnp.minimum(jnp.float32(math.pi / 4), theta_med)) + 1e-6)
    return s_new * logits, s_new


if __name__ == "__main__":
    # Small shapes consistent with the module: batch=8, emb_size=32, classes=16
    num_classes = 16
    emb_size = 32
    batch = 8

    key = jax.random.PRNGKey(0)
    kw, kx = jax.random.split(key)

    # deterministic parameter init, mirroring torch.randn(C, E) * 0.01
    weight = jax.random.normal(kw, (num_classes, emb_size), dtype=jnp.float32) * 0.01
    s_init = math.log2(num_classes - 1) * math.sqrt(2.0)

    x = jax.random.normal(kx, (batch, emb_size), dtype=jnp.float32)
    labels = jnp.array([3, 7, -1, 0, 15, 2, 9, 5], dtype=jnp.int32)

    out, s_new = adacos_forward(x, weight, labels, s_init)
    out = jax.block_until_ready(out)
    s_new = jax.block_until_ready(s_new)

    assert out.shape == (batch, num_classes) and out.dtype == jnp.float32
    assert bool(jnp.all(jnp.isfinite(out)))
    assert bool(jnp.isfinite(s_new))

    # relaxed-tolerance check vs. fp32 reference (bf16 MXU inputs => ~1e-3 on cos)
    ref_out, ref_s = adacos_reference(x, weight, labels, s_init)
    assert bool(jnp.max(jnp.abs(out - ref_out)) < 5e-2)
    assert bool(jnp.abs(s_new - ref_s) < 5e-2)

    print("KERNEL_OK")
</pallas_src>

<mosaic_0001>
module attributes {stable_mosaic.version = 11 : i64} {
  func.func @_rownorm_kernel(%arg0: i32, %arg1: memref<128x128xf32, #tpu.memory_space<vmem>>, %arg2: memref<128x128xbf16, #tpu.memory_space<vmem>>) attributes {dimension_semantics = [#tpu.dimension_semantics<parallel>], iteration_bounds = array<i64: 1>, scalar_prefetch = 0 : i64, scratch_operands = 0 : i64, tpu.core_type = #tpu.core_type<tc>, window_params = [{transform_indices = @transform_0, window_bounds = array<i64: 128, 128>}, {transform_indices = @transform_1, window_bounds = array<i64: 128, 128>}]} {
    %c0 = arith.constant 0 : index
    %c0_0 = arith.constant 0 : index
    %0 = vector.load %arg1[%c0, %c0_0] : memref<128x128xf32, #tpu.memory_space<vmem>>, vector<128x128xf32>
    %1 = arith.mulf %0, %0 : vector<128x128xf32>
    %cst = arith.constant dense<0.000000e+00> : vector<128xf32>
    %2 = vector.multi_reduction <add>, %1, %cst [1] : vector<128x128xf32> to vector<128xf32>
    %3 = vector.shape_cast %2 : vector<128xf32> to vector<128x1xf32>
    %cst_1 = arith.constant 1.000000e-24 : f32
    %4 = vector.broadcast %cst_1 : f32 to vector<128x1xf32>
    %5 = arith.maximumf %3, %4 : vector<128x1xf32>
    %6 = math.rsqrt %5 : vector<128x1xf32>
    %7 = vector.broadcast %6 : vector<128x1xf32> to vector<128x128xf32>
    %8 = arith.mulf %0, %7 : vector<128x128xf32>
    %9 = arith.truncf %8 : vector<128x128xf32> to vector<128x128xbf16>
    %c0_2 = arith.constant 0 : index
    %c0_3 = arith.constant 0 : index
    %10 = vector.load %arg2[%c0_2, %c0_3] : memref<128x128xbf16, #tpu.memory_space<vmem>>, vector<128x128xbf16>
    tpu.vector_store %arg2[%c0_2, %c0_3], %9 {strides = array<i32>} : memref<128x128xbf16, #tpu.memory_space<vmem>>, vector<128x128xbf16>,
    return
  }
  func.func @transform_0(%arg0: i32) -> (i32, i32) {
    %c0_i32 = arith.constant 0 : i32
    %c0_i32_0 = arith.constant 0 : i32
    return %arg0, %c0_i32 : i32, i32
  }
  func.func @transform_1(%arg0: i32) -> (i32, i32) {
    %c0_i32 = arith.constant 0 : i32
    %c0_i32_0 = arith.constant 0 : i32
    return %arg0, %c0_i32 : i32, i32
  }
}

</mosaic_0001>

<llo_original>
// kernel: tpu_custom_call.1
$region0: #{tpu_custom_call.1}
  #allocation0 [shape = 'u32[]', space=smem, size = 0x4, offset = 0x4, fixed_abs, tag = 'smem constant byte address 0x4 - core index']
  #allocation1 [shape = 'u32[144,128]{1,0:T(1,128)}', space=vmem, size = 0x12000, scoped, tag = 'internal scratch']
  %s0 = inlined_call_operand.hbm [shape: f32[128,128], index: 0, kind: input, shape index: {}]
  %s1 = inlined_call_operand.hbm [shape: bf16[128,128], index: 1, kind: output, shape index: {}]
  %s2 = sld [smem:[#allocation0]]
  $region18: #{tpu_custom_call.1} parent=0
    _
  %s4 = ssub.s32 1, %s2
  %s5 = scalar_select 0, %s4, %s2
  $region1: #{tpu_custom_call.1} parent=0
    #allocation2 [shape = 'u8[65536]{0}', space=vmem, size = 0x10000, scoped, tag = 'input window, operand 0, single buffered']
    #allocation3 [shape = 's32[1]{0}', space=sflag, size = 0x4, scoped, tag = 'scoped memory for tpu_custom_call.1']
    #allocation4 [shape = 's32[1]{0}', space=sflag, size = 0x4, scoped, tag = 'scoped memory for tpu_custom_call.1']
    #allocation5 [shape = 'u8[32768]{0}', space=vmem, size = 0x8000, scoped, tag = 'output window, operand 0, single buffered']
    %6 = vsyncpa [#allocation3], 0
    %7 = vsyncpa [#allocation4], 0
    // Predicated region
    $region2: #{tpu_custom_call.1} parent=1 // pred_check
      _
    $region3: #{tpu_custom_call.1} parent=1 // pred_check_branch
      %9 = sbr.rel (0) target = $region5
    $region4: #{tpu_custom_call.1} parent=1 // pred_region
      %s11 = ssub.s32 2048, 2048
      %12 = vsyncadd [#allocation3], %s11
      %s13 = sshll.u32 [#allocation2], 4
      %s14 = int_to_ptr.vmem [resolvable:$true] %s13
      %19 = dma.hbm_to_vmem [thread:$0]  %s0, 2048, %s14, [#allocation3], 128, 128, 8
    $region5: #{tpu_custom_call.1} parent=1 // pred_fallthru
      _
    // Predicated region
    $region6: #{tpu_custom_call.1} parent=1 // pred_check
      _
    $region7: #{tpu_custom_call.1} parent=1 // pred_check_branch
      %21 = sbr.rel (0) target = $region9
    $region8: #{tpu_custom_call.1} parent=1 // pred_region
      %22 = dma.done [#allocation3], 2048
    $region9: #{tpu_custom_call.1} parent=1 // pred_fallthru
      _
    %v23 = vld [vmem:[#allocation2] sm:$0xff]
    %v24 = vld [vmem:[#allocation2 + $0x8] sm:$0xff]
    %v25 = vld [vmem:[#allocation2 + $0x10] sm:$0xff]
    %v26 = vld [vmem:[#allocation2 + $0x18] sm:$0xff]
    %v27 = vld [vmem:[#allocation2 + $0x20] sm:$0xff]
    %v28 = vld [vmem:[#allocation2 + $0x28] sm:$0xff]
    %v29 = vld [vmem:[#allocation2 + $0x30] sm:$0xff]
    %v30 = vld [vmem:[#allocation2 + $0x38] sm:$0xff]
    %v31 = vld [vmem:[#allocation2 + $0x40] sm:$0xff]
    %v32 = vld [vmem:[#allocation2 + $0x48] sm:$0xff]
    %v33 = vld [vmem:[#allocation2 + $0x50] sm:$0xff]
    %v34 = vld [vmem:[#allocation2 + $0x58] sm:$0xff]
    %v35 = vld [vmem:[#allocation2 + $0x60] sm:$0xff]
    %v36 = vld [vmem:[#allocation2 + $0x68] sm:$0xff]
    %v37 = vld [vmem:[#allocation2 + $0x70] sm:$0xff]
    %v38 = vld [vmem:[#allocation2 + $0x78] sm:$0xff]
    %v39 = vmul.f32 %v23, %v23
    %v40 = vmul.f32 %v24, %v24
    %v41 = vmul.f32 %v25, %v25
    %v42 = vmul.f32 %v26, %v26
    %v43 = vmul.f32 %v27, %v27
    %v44 = vmul.f32 %v28, %v28
    %v45 = vmul.f32 %v29, %v29
    %v46 = vmul.f32 %v30, %v30
    %v47 = vmul.f32 %v31, %v31
    %v48 = vmul.f32 %v32, %v32
    %v49 = vmul.f32 %v33, %v33
    %v50 = vmul.f32 %v34, %v34
    %v51 = vmul.f32 %v35, %v35
    %v52 = vmul.f32 %v36, %v36
    %v53 = vmul.f32 %v37, %v37
    %v54 = vmul.f32 %v38, %v38
    %55 = vadd.xlane.f32.xlu0 %v39
    %v56 = vpop.xlane.xlu0 %55
    %57 = vadd.xlane.f32.xlu0 %v40
    %v58 = vpop.xlane.xlu0 %57
    %59 = vadd.xlane.f32.xlu0 %v41
    %v60 = vpop.xlane.xlu0 %59
    %61 = vadd.xlane.f32.xlu0 %v42
    %v62 = vpop.xlane.xlu0 %61
    %63 = vadd.xlane.f32.xlu0 %v43
    %v64 = vpop.xlane.xlu0 %63
    %65 = vadd.xlane.f32.xlu0 %v44
    %v66 = vpop.xlane.xlu0 %65
    %67 = vadd.xlane.f32.xlu0 %v45
    %v68 = vpop.xlane.xlu0 %67
    %69 = vadd.xlane.f32.xlu0 %v46
    %v70 = vpop.xlane.xlu0 %69
    %71 = vadd.xlane.f32.xlu0 %v47
    %v72 = vpop.xlane.xlu0 %71
    %73 = vadd.xlane.f32.xlu0 %v48
    %v74 = vpop.xlane.xlu0 %73
    %75 = vadd.xlane.f32.xlu0 %v49
    %v76 = vpop.xlane.xlu0 %75
    %77 = vadd.xlane.f32.xlu0 %v50
    %v78 = vpop.xlane.xlu0 %77
    %79 = vadd.xlane.f32.xlu0 %v51
    %v80 = vpop.xlane.xlu0 %79
    %81 = vadd.xlane.f32.xlu0 %v52
    %v82 = vpop.xlane.xlu0 %81
    %83 = vadd.xlane.f32.xlu0 %v53
    %v84 = vpop.xlane.xlu0 %83
    %85 = vadd.xlane.f32.xlu0 %v54
    %v86 = vpop.xlane.xlu0 %85
    %v87 = vmax.f32 %v56, 1e-24
    %v88 = vmax.f32 %v58, 1e-24
    %v89 = vmax.f32 %v60, 1e-24
    %v90 = vmax.f32 %v62, 1e-24
    %v91 = vmax.f32 %v64, 1e-24
    %v92 = vmax.f32 %v66, 1e-24
    %v93 = vmax.f32 %v68, 1e-24
    %v94 = vmax.f32 %v70, 1e-24
    %v95 = vmax.f32 %v72, 1e-24
    %v96 = vmax.f32 %v74, 1e-24
    %v97 = vmax.f32 %v76, 1e-24
    %v98 = vmax.f32 %v78, 1e-24
    %v99 = vmax.f32 %v80, 1e-24
    %v100 = vmax.f32 %v82, 1e-24
    %v101 = vmax.f32 %v84, 1e-24
    %v102 = vmax.f32 %v86, 1e-24
    %v103 = vrsqrt.pop %v87
    %v104 = vrsqrt.pop %v88
    %v105 = vrsqrt.pop %v89
    %v106 = vrsqrt.pop %v90
    %v107 = vrsqrt.pop %v91
    %v108 = vrsqrt.pop %v92
    %v109 = vrsqrt.pop %v93
    %v110 = vrsqrt.pop %v94
    %v111 = vrsqrt.pop %v95
    %v112 = vrsqrt.pop %v96
    %v113 = vrsqrt.pop %v97
    %v114 = vrsqrt.pop %v98
    %v115 = vrsqrt.pop %v99
    %v116 = vrsqrt.pop %v100
    %v117 = vrsqrt.pop %v101
    %v118 = vrsqrt.pop %v102
    %v119 = vmul.f32 %v23, %v103
    %v120 = vmul.f32 %v24, %v104
    %v121 = vmul.f32 %v25, %v105
    %v122 = vmul.f32 %v26, %v106
    %v123 = vmul.f32 %v27, %v107
    %v124 = vmul.f32 %v28, %v108
    %v125 = vmul.f32 %v29, %v109
    %v126 = vmul.f32 %v30, %v110
    %v127 = vmul.f32 %v31, %v111
    %v128 = vmul.f32 %v32, %v112
    %v129 = vmul.f32 %v33, %v113
    %v130 = vmul.f32 %v34, %v114
    %v131 = vmul.f32 %v35, %v115
    %v132 = vmul.f32 %v36, %v116
    %v133 = vmul.f32 %v37, %v117
    %v134 = vmul.f32 %v38, %v118
    %v135 = vpack.c.bf16 %v120, %v119
    %v136 = vpack.c.bf16 %v122, %v121
    %v137 = vpack.c.bf16 %v124, %v123
    %v138 = vpack.c.bf16 %v126, %v125
    %v139 = vpack.c.bf16 %v128, %v127
    %v140 = vpack.c.bf16 %v130, %v129
    %v141 = vpack.c.bf16 %v132, %v131
    %v142 = vpack.c.bf16 %v134, %v133
    %v151 = vunpack.c.l.b16 %v135
    %v152 = vunpack.c.h.b16 %v135
    %v153 = vunpack.c.l.b16 %v136
    %v154 = vunpack.c.h.b16 %v136
    %v155 = vunpack.c.l.b16 %v137
    %v156 = vunpack.c.h.b16 %v137
    %v157 = vunpack.c.l.b16 %v138
    %v158 = vunpack.c.h.b16 %v138
    %v159 = vunpack.c.l.b16 %v139
    %v160 = vunpack.c.h.b16 %v139
    %v161 = vunpack.c.l.b16 %v140
    %v162 = vunpack.c.h.b16 %v140
    %v163 = vunpack.c.l.b16 %v141
    %v164 = vunpack.c.h.b16 %v141
    %v165 = vunpack.c.l.b16 %v142
    %v166 = vunpack.c.h.b16 %v142
    %v167 = vpack.c.b16 %v151, %v151
    %v168 = vpack.c.b16 %v152, %v152
    %v169 = vpack.c.b16 %v153, %v153
    %v170 = vpack.c.b16 %v154, %v154
    %v171 = vpack.c.b16 %v155, %v155
    %v172 = vpack.c.b16 %v156, %v156
    %v173 = vpack.c.b16 %v157, %v157
    %v174 = vpack.c.b16 %v158, %v158
    %v175 = vpack.c.b16 %v159, %v159
    %v176 = vpack.c.b16 %v160, %v160
    %v177 = vpack.c.b16 %v161, %v161
    %v178 = vpack.c.b16 %v162, %v162
    %v179 = vpack.c.b16 %v163, %v163
    %v180 = vpack.c.b16 %v164, %v164
    %v181 = vpack.c.b16 %v165, %v165
    %v182 = vpack.c.b16 %v166, %v166
    %199 = vst [vmem:[#allocation5] sm:$0xf] %v167
    %200 = vst [vmem:[#allocation5 + $0x4] sm:$0xf] %v168
    %201 = vst [vmem:[#allocation5 + $0x8] sm:$0xf] %v169
    %202 = vst [vmem:[#allocation5 + $0xc] sm:$0xf] %v170
    %203 = vst [vmem:[#allocation5 + $0x10] sm:$0xf] %v171
    %204 = vst [vmem:[#allocation5 + $0x14] sm:$0xf] %v172
    %205 = vst [vmem:[#allocation5 + $0x18] sm:$0xf] %v173
    %206 = vst [vmem:[#allocation5 + $0x1c] sm:$0xf] %v174
    %207 = vst [vmem:[#allocation5 + $0x20] sm:$0xf] %v175
    %208 = vst [vmem:[#allocation5 + $0x24] sm:$0xf] %v176
    %209 = vst [vmem:[#allocation5 + $0x28] sm:$0xf] %v177
    %210 = vst [vmem:[#allocation5 + $0x2c] sm:$0xf] %v178
    %211 = vst [vmem:[#allocation5 + $0x30] sm:$0xf] %v179
    %212 = vst [vmem:[#allocation5 + $0x34] sm:$0xf] %v180
    %213 = vst [vmem:[#allocation5 + $0x38] sm:$0xf] %v181
    %214 = vst [vmem:[#allocation5 + $0x3c] sm:$0xf] %v182
    // Predicated region
    $region10: #{tpu_custom_call.1} parent=1 // pred_check
      _
    $region11: #{tpu_custom_call.1} parent=1 // pred_check_branch
      %216 = sbr.rel (0) target = $region13
    $region12: #{tpu_custom_call.1} parent=1 // pred_region
      %s218 = ssub.s32 1024, 1024
      %219 = vsyncadd [#allocation4], %s218
      %s220 = sshll.u32 [#allocation5], 4
      %s221 = int_to_ptr.vmem [resolvable:$true] %s220
      %226 = dma.vmem_to_hbm [thread:$0]  %s221, 1024, %s1, [#allocation4], 64, 64, 4
    $region13: #{tpu_custom_call.1} parent=1 // pred_fallthru
      _
    // Predicated region
    $region14: #{tpu_custom_call.1} parent=1 // pred_check
      _
    $region15: #{tpu_custom_call.1} parent=1 // pred_check_branch
      %228 = sbr.rel (0) target = $region17
    $region16: #{tpu_custom_call.1} parent=1 // pred_region
      %229 = dma.done [#allocation4], 1024
    $region17: #{tpu_custom_call.1} parent=1 // pred_fallthru
      _
    %230 = vsyncpa [#allocation3], 1
    %231 = vsyncpa [#allocation4], 1

</llo_original>
